<compile_context>
chip_gen: v7x
topology: tpu7x:2x2x1
jax: 0.10.0
libtpu: 0.0.40
codegen_flags: <defaults>
</compile_context>

<pallas_src>
import functools

import jax
import jax.numpy as jnp
from jax.experimental import pallas as pl
from jax.experimental.pallas import tpu as pltpu


def _loss_kernel(x_ref, y_ref, w_ref, o_ref, *, inv_batch):
    # One fused pass: diff -> branch select -> coordinate weighting -> reduce.
    z = x_ref[...].astype(jnp.float32) - y_ref[...].astype(jnp.float32)
    az = jnp.abs(z)
    small = az < 0.01                                   # quadratic-branch mask
    mse_term = jnp.where(small, 0.5 * z * z, 0.0)       # 0.5 * (masked z)^2
    # |l1| with l1 = z masked to |z| >= 0.01; the -0.005 hits every element,
    # matching the PyTorch reference.
    l1_term = 0.01 * (jnp.where(small, 0.0, az) - 0.005)
    per_elem = (mse_term + l1_term) * w_ref[...]        # (1,N) broadcasts over rows
    o_ref[0, 0] = jnp.sum(per_elem) * inv_batch


def coord_weight_smooth_l1_loss(x, y, coord_weight=(1.0, 1.0, 1.0)):
    """Pallas implementation of coord_weight_SmoothL1Loss.forward."""
    assert x.shape == y.shape, (x.shape, y.shape)
    B = x.shape[0]
    x2 = x.reshape(B, -1)                               # == x.view(B, -1, 3), flattened
    y2 = y.reshape(B, -1)
    N = x2.shape[1]
    assert N % 3 == 0, "flattened per-sample size must be a multiple of 3"

    # Per-column weight row matching the (B, J, 3) -> (B, J*3) flatten order
    # (coordinate index is fastest-varying), kept lane-dense next to the data.
    w_row = jnp.tile(jnp.asarray(coord_weight, jnp.float32).reshape(1, 3),
                     (1, N // 3))

    def full_spec(shape):
        # Whole-array block: legal even when dims aren't (8,128)-aligned,
        # because block_shape == full array dims.
        return pl.BlockSpec(shape, lambda i, _s=shape: (0,) * len(_s))

    total_elems = B * N
    cost = pl.CostEstimate(
        flops=8 * total_elems,
        transcendentals=0,
        bytes_accessed=(2 * total_elems + N) * 4 + 4,
    )

    out = pl.pallas_call(
        functools.partial(_loss_kernel, inv_batch=1.0 / float(B)),
        out_shape=jax.ShapeDtypeStruct((1, 1), jnp.float32),
        grid_spec=pltpu.PrefetchScalarGridSpec(
            num_scalar_prefetch=0,
            grid=(1,),
            in_specs=[
                full_spec(x2.shape),
                full_spec(y2.shape),
                full_spec(w_row.shape),
            ],
            out_specs=pl.BlockSpec((1, 1), lambda i: (0, 0),
                                   memory_space=pltpu.MemorySpace.SMEM),
        ),
        compiler_params=pltpu.CompilerParams(
            dimension_semantics=("arbitrary",),
        ),
        cost_estimate=cost,
    )(x2, y2, w_row)
    return out[0, 0]


def loss_reference(x, y, coord_weight=(1.0, 1.0, 1.0)):
    """Pure-JAX port of the PyTorch module, for verification."""
    w = jnp.asarray(coord_weight, jnp.float32).reshape(1, 1, 3)
    B = x.shape[0]
    xr = x.reshape(B, -1, 3).astype(jnp.float32)
    yr = y.reshape(B, -1, 3).astype(jnp.float32)
    z = xr - yr
    az = jnp.abs(z)
    mse = jnp.where(az < 0.01, z, 0.0)
    l1 = jnp.where(az >= 0.01, z, 0.0)
    mse_loss = jnp.sum(0.5 * mse * mse * w)
    l1_loss = jnp.sum(0.01 * (jnp.abs(l1) - 0.005) * w)
    return (mse_loss + l1_loss) / B


if __name__ == "__main__":
    batch = 2
    joint_num = 14
    coord_weight = (1.0, 0.5, 2.0)

    key = jax.random.PRNGKey(0)
    kx, kd = jax.random.split(key)

    # Skeleton-coordinate-style inputs: (B, joint_num, 3).
    x = jax.random.normal(kx, (batch, joint_num, 3), jnp.float32)
    # Perturbation scaled so both |z| < 0.01 (quadratic) and |z| >= 0.01
    # (linear) branches are exercised.
    delta = jax.random.normal(kd, (batch, joint_num, 3), jnp.float32) * 0.02
    y = x + delta

    loss = coord_weight_smooth_l1_loss(x, y, coord_weight)
    loss = jax.block_until_ready(loss)
    assert loss.shape == (), loss.shape

    ref = loss_reference(x, y, coord_weight)
    assert jnp.allclose(loss, ref, atol=1e-6, rtol=1e-5), (
        float(loss), float(ref))

    print("KERNEL_OK")
</pallas_src>

<mosaic_0001>
module attributes {stable_mosaic.version = 11 : i64} {
  func.func @_loss_kernel(%arg0: i32, %arg1: memref<2x42xf32, #tpu.memory_space<vmem>>, %arg2: memref<2x42xf32, #tpu.memory_space<vmem>>, %arg3: memref<1x42xf32, #tpu.memory_space<vmem>>, %arg4: memref<1x1xf32, #tpu.memory_space<smem>>) attributes {dimension_semantics = [#tpu.dimension_semantics<arbitrary>], iteration_bounds = array<i64: 1>, scalar_prefetch = 0 : i64, scratch_operands = 0 : i64, tpu.core_type = #tpu.core_type<tc>, window_params = [{pipeline_mode = #tpu.pipeline_mode<synchronous>, transform_indices = @transform_0, window_bounds = array<i64: 2, 42>}, {pipeline_mode = #tpu.pipeline_mode<synchronous>, transform_indices = @transform_1, window_bounds = array<i64: 2, 42>}, {pipeline_mode = #tpu.pipeline_mode<synchronous>, transform_indices = @transform_2, window_bounds = array<i64: 1, 42>}, {transform_indices = @transform_3, window_bounds = array<i64: 1, 1>}]} {
    %c0 = arith.constant 0 : index
    %c0_0 = arith.constant 0 : index
    %0 = vector.load %arg1[%c0, %c0_0] : memref<2x42xf32, #tpu.memory_space<vmem>>, vector<2x42xf32>
    %c0_1 = arith.constant 0 : index
    %c0_2 = arith.constant 0 : index
    %1 = vector.load %arg2[%c0_1, %c0_2] : memref<2x42xf32, #tpu.memory_space<vmem>>, vector<2x42xf32>
    %2 = arith.subf %0, %1 : vector<2x42xf32>
    %3 = math.absf %2 : vector<2x42xf32>
    %cst = arith.constant 0.00999999977 : f32
    %4 = vector.broadcast %cst : f32 to vector<2x42xf32>
    %5 = arith.cmpf olt, %3, %4 : vector<2x42xf32>
    %cst_3 = arith.constant 5.000000e-01 : f32
    %6 = vector.broadcast %cst_3 : f32 to vector<2x42xf32>
    %7 = arith.mulf %6, %2 : vector<2x42xf32>
    %8 = arith.mulf %7, %2 : vector<2x42xf32>
    %cst_4 = arith.constant 0.000000e+00 : f32
    %9 = vector.broadcast %cst_4 : f32 to vector<2x42xf32>
    %10 = arith.select %5, %8, %9 : vector<2x42xi1>, vector<2x42xf32>
    %cst_5 = arith.constant 0.000000e+00 : f32
    %11 = vector.broadcast %cst_5 : f32 to vector<2x42xf32>
    %12 = arith.select %5, %11, %3 : vector<2x42xi1>, vector<2x42xf32>
    %cst_6 = arith.constant 5.000000e-03 : f32
    %13 = vector.broadcast %cst_6 : f32 to vector<2x42xf32>
    %14 = arith.subf %12, %13 : vector<2x42xf32>
    %cst_7 = arith.constant 0.00999999977 : f32
    %15 = vector.broadcast %cst_7 : f32 to vector<2x42xf32>
    %16 = arith.mulf %15, %14 : vector<2x42xf32>
    %17 = arith.addf %10, %16 : vector<2x42xf32>
    %c0_8 = arith.constant 0 : index
    %c0_9 = arith.constant 0 : index
    %18 = vector.load %arg3[%c0_8, %c0_9] : memref<1x42xf32, #tpu.memory_space<vmem>>, vector<1x42xf32>
    %19 = vector.broadcast %18 : vector<1x42xf32> to vector<2x42xf32>
    %20 = arith.mulf %17, %19 : vector<2x42xf32>
    %21 = vector.shape_cast %20 : vector<2x42xf32> to vector<1x2x42xf32>
    %cst_10 = arith.constant dense<0.000000e+00> : vector<1xf32>
    %22 = vector.multi_reduction <add>, %21, %cst_10 [1, 2] : vector<1x2x42xf32> to vector<1xf32>
    %23 = vector.shape_cast %22 : vector<1xf32> to vector<1x1x1xf32>
    %24 = vector.extract %23[0, 0, 0] : f32 from vector<1x1x1xf32>
    %cst_11 = arith.constant 5.000000e-01 : f32
    %25 = arith.mulf %24, %cst_11 : f32
    %c0_12 = arith.constant 0 : index
    %c0_13 = arith.constant 0 : index
    %26 = memref.load %arg4[%c0_12, %c0_13] : memref<1x1xf32, #tpu.memory_space<smem>>
    memref.store %25, %arg4[%c0_12, %c0_13] : memref<1x1xf32, #tpu.memory_space<smem>>
    return
  }
  func.func @transform_0(%arg0: i32) -> (i32, i32) {
    %c0_i32 = arith.constant 0 : i32
    %c0_i32_0 = arith.constant 0 : i32
    %c0_i32_1 = arith.constant 0 : i32
    return %c0_i32, %c0_i32_0 : i32, i32
  }
  func.func @transform_1(%arg0: i32) -> (i32, i32) {
    %c0_i32 = arith.constant 0 : i32
    %c0_i32_0 = arith.constant 0 : i32
    %c0_i32_1 = arith.constant 0 : i32
    return %c0_i32, %c0_i32_0 : i32, i32
  }
  func.func @transform_2(%arg0: i32) -> (i32, i32) {
    %c0_i32 = arith.constant 0 : i32
    %c0_i32_0 = arith.constant 0 : i32
    %c0_i32_1 = arith.constant 0 : i32
    return %c0_i32, %c0_i32_0 : i32, i32
  }
  func.func @transform_3(%arg0: i32) -> (i32, i32) {
    %c0_i32 = arith.constant 0 : i32
    %c0_i32_0 = arith.constant 0 : i32
    %c0_i32_1 = arith.constant 0 : i32
    return %c0_i32, %c0_i32_0 : i32, i32
  }
}

</mosaic_0001>

<llo_original>
// kernel: tpu_custom_call.1
$region0: #{tpu_custom_call.1}
  #allocation0 [shape = 'u32[]', space=smem, size = 0x4, offset = 0x4, fixed_abs, tag = 'smem constant byte address 0x4 - core index']
  #allocation1 [shape = 'u32[144,128]{1,0:T(1,128)}', space=vmem, size = 0x12000, scoped, tag = 'internal scratch']
  %s0 = inlined_call_operand.hbm [shape: f32[2,42], index: 0, kind: input, shape index: {}]
  %s1 = inlined_call_operand.vmem [shape: f32[2,42], index: 1, kind: input, shape index: {}]
  %s2 = inlined_call_operand.vmem [shape: f32[1,42], index: 2, kind: input, shape index: {}]
  %s3 = inlined_call_operand.hbm [shape: f32[1,1], index: 3, kind: output, shape index: {}]
  %s4 = sld [smem:[#allocation0]]
  $region26: #{tpu_custom_call.1} parent=0
    _
  %s6 = ssub.s32 1, %s4
  %s7 = scalar_select 0, %s6, %s4
  $region1: #{tpu_custom_call.1} parent=0
    #allocation2 [shape = 'u8[1024]{0}', space=vmem, size = 0x400, scoped, tag = 'input window, operand 0, single buffered']
    #allocation3 [shape = 's32[1]{0}', space=sflag, size = 0x4, scoped, tag = 'scoped memory for tpu_custom_call.1']
    #allocation4 [shape = 's32[1]{0}', space=sflag, size = 0x4, scoped, tag = 'scoped memory for tpu_custom_call.1']
    #allocation5 [shape = 'u8[512]{0}', space=smem, size = 0x200, scoped, tag = 'output window, operand 0, single buffered']
    %8 = vsyncpa [#allocation3], 0
    %9 = vsyncpa [#allocation4], 0
    // Predicated region
    $region2: #{tpu_custom_call.1} parent=1 // pred_check
      _
    $region3: #{tpu_custom_call.1} parent=1 // pred_check_branch
      %11 = sbr.rel (0) target = $region5
    $region4: #{tpu_custom_call.1} parent=1 // pred_region
      %s13 = ssub.s32 32, 32
      %14 = vsyncadd [#allocation3], %s13
      %s16 = sshll.u32 [#allocation2], 4
      %s17 = int_to_ptr.vmem [resolvable:$true] %s16
      %19 = dma.hbm_to_vmem [thread:$0]  %s0, 32, %s17, [#allocation3]
    $region5: #{tpu_custom_call.1} parent=1 // pred_fallthru
      _
    // Predicated region
    $region6: #{tpu_custom_call.1} parent=1 // pred_check
      _
    $region7: #{tpu_custom_call.1} parent=1 // pred_check_branch
      %21 = sbr.rel (0) target = $region9
    $region8: #{tpu_custom_call.1} parent=1 // pred_region
      _
    $region9: #{tpu_custom_call.1} parent=1 // pred_fallthru
      _
    // Predicated region
    $region10: #{tpu_custom_call.1} parent=1 // pred_check
      _
    $region11: #{tpu_custom_call.1} parent=1 // pred_check_branch
      %23 = sbr.rel (0) target = $region13
    $region12: #{tpu_custom_call.1} parent=1 // pred_region
      _
    $region13: #{tpu_custom_call.1} parent=1 // pred_fallthru
      _
    // Predicated region
    $region14: #{tpu_custom_call.1} parent=1 // pred_check
      _
    $region15: #{tpu_custom_call.1} parent=1 // pred_check_branch
      %25 = sbr.rel (0) target = $region17
    $region16: #{tpu_custom_call.1} parent=1 // pred_region
      %26 = dma.done [#allocation3], 32
    $region17: #{tpu_custom_call.1} parent=1 // pred_fallthru
      _
    %v27 = vld [vmem:[#allocation2] sm:$0x3]
    %v28 = vld [vmem:[%s1] sm:$0x3]
    %v29 = vsub.f32 %v27, %v28
    %v30 = vand.u32 2147483647, %v29
    %vm31 = vcmp.lt.f32.partialorder %v30, 0.01
    %v32 = vmul.f32 %v29, 0.5
    %v33 = vmul.f32 %v32, %v29
    %v34 = vsel %vm31, %v33, 0.0
    %v35 = vsel %vm31, 0.0, %v30
    %v36 = vsub.f32 %v35, 0.005
    %v37 = vmul.f32 %v36, 0.01
    %v38 = vadd.f32 %v34, %v37
    %v39 = vld [vmem:[%s2] sm:$0x1]
    %v41 = vlaneseq
    %v42 = vshrl.u32 %v41, 7
    %v43 = vsub.s32 0, %v42
    %v44 = vrot.slane %v39, %v43
    %v46 = vmul.f32 %v38, %v44
    %vm47 = vcmask 336896
    %v48 = vsel %vm47, %v46, 0.0
    %49 = vadd.xlane.f32.xlu0 %v48
    %v50 = vpop.xlane.xlu0 %49
    %v51 = vrot.slane %v50, 4
    %v52 = vadd.f32 %v50, %v51
    %v53 = vrot.slane %v52, 2
    %v54 = vadd.f32 %v52, %v53
    %v55 = vrot.slane %v54, 1
    %v56 = vadd.f32 %v54, %v55
    %s57 = vtos %v56
    %s58 = smul.f32 %s57, 0.5
    %s59 = scalar_lea.smem [#allocation5], 0
    %60 = sst [smem:[%s59]] %s58
    // Predicated region
    $region18: #{tpu_custom_call.1} parent=1 // pred_check
      _
    $region19: #{tpu_custom_call.1} parent=1 // pred_check_branch
      %62 = sbr.rel (0) target = $region21
    $region20: #{tpu_custom_call.1} parent=1 // pred_region
      %s64 = ssub.s32 16, 16
      %65 = vsyncadd [#allocation4], %s64
      %68 = dma.smem_to_hbm [#allocation5], 16, %s3, [#allocation4]
    $region21: #{tpu_custom_call.1} parent=1 // pred_fallthru
      _
    // Predicated region
    $region22: #{tpu_custom_call.1} parent=1 // pred_check
      _
    $region23: #{tpu_custom_call.1} parent=1 // pred_check_branch
      %70 = sbr.rel (0) target = $region25
    $region24: #{tpu_custom_call.1} parent=1 // pred_region
      %71 = dma.done [#allocation4], 16
    $region25: #{tpu_custom_call.1} parent=1 // pred_fallthru
      _
    %72 = sfence
    %73 = vsyncpa [#allocation3], 1
    %74 = vsyncpa [#allocation4], 1

</llo_original>
